<compile_context>
chip_gen: v5e
topology: v5e:2x2
jax: 0.10.0
libtpu: 0.0.40
codegen_flags: <defaults>
</compile_context>

<pallas_src>
import jax
import jax.numpy as jnp
from jax import lax
from jax.experimental import pallas as pl
from jax.experimental.pallas import tpu as pltpu


def _linear_kernel(x_ref, w_ref, o_ref, acc_ref):
    # x_ref:   (TB, TK)  input rows, K-chunk
    # w_ref:   (TN, TK)  weight in PyTorch orientation (out_features, in_features)
    # o_ref:   (TB, TN)  output tile
    # acc_ref: (TB, TN)  f32 accumulator, resident across the K axis
    k = pl.program_id(2)

    @pl.when(k == 0)
    def _():
        acc_ref[...] = jnp.zeros_like(acc_ref)

    # out[b, n] = sum_f x[b, f] * w[n, f]  -- contract axis 1 of both operands,
    # so no transpose of the weight is ever materialized.
    acc_ref[...] += lax.dot_general(
        x_ref[...],
        w_ref[...],
        dimension_numbers=(((1,), (1,)), ((), ())),
        preferred_element_type=jnp.float32,
    )

    @pl.when(k == pl.num_programs(2) - 1)
    def _():
        o_ref[...] = acc_ref[...].astype(o_ref.dtype)


def _round_up(n, m):
    return ((n + m - 1) // m) * m


def _pick_tile(dim, candidates):
    """Largest candidate that exactly divides `dim`, else the full dim.

    Exact division keeps reduction (K) tiles free of garbage contributions and
    keeps N tiles aligned; a full-dim block is always layout-legal.
    """
    for c in candidates:
        if dim >= c and dim % c == 0:
            return c
    return dim


def linear_sk_forward(x, w1, *, max_tb=512, force_pallas=False):
    """forward(x) = x @ w1.T   with x: (..., F) f32, w1: (E, F) f32 -> (..., E) f32."""
    E, F = w1.shape
    orig_shape = x.shape
    if x.ndim != 2:
        x = x.reshape(-1, F)
    B, F2 = x.shape
    assert F == F2, "feature-size mismatch"

    # Tiny problems: a 1-step Pallas grid is pure launch/DMA overhead; let XLA
    # handle them directly unless the caller insists on the kernel path.
    if not force_pallas and B * E * F <= (1 << 18):
        out = x @ w1.T
        return out.reshape(orig_shape[:-1] + (E,))

    # ---- batch tiling ----------------------------------------------------
    # No zero-padded copy of x: the grid uses cdiv and Pallas masks the
    # out-of-bounds writes of the partial last block (rows are independent).
    if B <= 8:
        TB = B                                   # full-dim block, always legal
    else:
        # At least two batch tiles so the "parallel" axis shards across the
        # two TensorCores on v7x; cap per tile at max_tb (HBM-roofline knee).
        TB = min(max_tb, _round_up(pl.cdiv(B, 2), 8))

    # ---- N / K tiling ------------------------------------------------------
    # 256/512-aligned tiles feed the 2x256 MXU on v6e/v7x; full-dim blocks for
    # small or non-divisible dims. K tiles must divide F exactly (reduction).
    TN = _pick_tile(E, (512, 256, 128))
    TK = _pick_tile(F, (512, 256))
    # NOTE: for very large E not divisible by 128, pre-pad W1 once at parameter
    # load time (lane-dense stores) rather than per call; not done here.

    grid = (pl.cdiv(B, TB), pl.cdiv(E, TN), F // TK)

    out = pl.pallas_call(
        _linear_kernel,
        out_shape=jax.ShapeDtypeStruct((B, E), jnp.float32),
        grid=grid,
        in_specs=[
            pl.BlockSpec((TB, TK), lambda i, j, k: (i, k)),   # activations
            pl.BlockSpec((TN, TK), lambda i, j, k: (j, k)),   # weight tile
        ],
        out_specs=pl.BlockSpec((TB, TN), lambda i, j, k: (i, j)),
        scratch_shapes=[pltpu.VMEM((TB, TN), jnp.float32)],
        compiler_params=pltpu.CompilerParams(
            dimension_semantics=("parallel", "parallel", "arbitrary"),
            vmem_limit_bytes=32 * 1024 * 1024,
        ),
    )(x, w1)

    return out.reshape(orig_shape[:-1] + (E,))


if __name__ == "__main__":
    # Small shapes consistent with the module: feat_size=16, dim_emb=32, batch=8
    batch, feat_size, dim_emb = 8, 16, 32

    key = jax.random.PRNGKey(0)
    k_x, k_w1, k_x2, k_w12 = jax.random.split(key, 4)

    x = jax.random.normal(k_x, (batch, feat_size), dtype=jnp.float32)

    # Deterministic parameter init (mimic nn.Linear's uniform(-1/sqrt(fan_in), +1/sqrt(fan_in)))
    bound1 = 1.0 / (feat_size ** 0.5)
    w1 = jax.random.uniform(
        k_w1, (dim_emb, feat_size), dtype=jnp.float32, minval=-bound1, maxval=bound1
    )
    # relu1 / linear_layer2 exist in the module but are unused in forward.

    # Force the Pallas path so the kernel itself is exercised at the demo size.
    out = linear_sk_forward(x, w1, force_pallas=True)
    out = jax.block_until_ready(out)
    ref = x @ w1.T
    assert out.shape == (batch, dim_emb)
    assert jnp.allclose(out, ref, atol=1e-5, rtol=1e-5)

    # Medium shape: exercises N tiling, a partial (masked) batch tile, and the
    # multi-tile parallel batch axis -- no wrapper-side padding anywhere.
    B2, F2, E2 = 300, 256, 384
    x2 = jax.random.normal(k_x2, (B2, F2), dtype=jnp.float32)
    w12 = jax.random.uniform(
        k_w12, (E2, F2), dtype=jnp.float32,
        minval=-1.0 / (F2 ** 0.5), maxval=1.0 / (F2 ** 0.5)
    )
    out2 = jax.block_until_ready(linear_sk_forward(x2, w12))
    ref2 = x2 @ w12.T
    assert out2.shape == (B2, E2)
    assert jnp.allclose(out2, ref2, atol=1e-4, rtol=1e-4)

    print("KERNEL_OK")
</pallas_src>

<mosaic_0001>
module attributes {stable_mosaic.version = 11 : i64} {
  func.func @_linear_kernel(%arg0: i32, %arg1: i32, %arg2: i32, %arg3: memref<8x16xf32, #tpu.memory_space<vmem>>, %arg4: memref<32x16xf32, #tpu.memory_space<vmem>>, %arg5: memref<8x32xf32, #tpu.memory_space<vmem>>, %arg6: memref<8x32xf32, #tpu.memory_space<vmem>>) attributes {dimension_semantics = [#tpu.dimension_semantics<parallel>, #tpu.dimension_semantics<parallel>, #tpu.dimension_semantics<arbitrary>], iteration_bounds = array<i64: 1, 1, 1>, scalar_prefetch = 0 : i64, scratch_operands = 1 : i64, tpu.core_type = #tpu.core_type<tc>, window_params = [{transform_indices = @transform_0, window_bounds = array<i64: 8, 16>}, {transform_indices = @transform_1, window_bounds = array<i64: 32, 16>}, {transform_indices = @transform_2, window_bounds = array<i64: 8, 32>}]} {
    %c0_i32 = arith.constant 0 : i32
    %0 = arith.cmpi eq, %arg2, %c0_i32 : i32
    %1 = arith.extui %0 : i1 to i32
    %c0_i32_0 = arith.constant 0 : i32
    %2 = arith.cmpi ne, %1, %c0_i32_0 : i32
    scf.if %2 {
      %cst_10 = arith.constant 0.000000e+00 : f32
      %12 = vector.broadcast %cst_10 : f32 to vector<8x32xf32>
      %c0_11 = arith.constant 0 : index
      %c0_12 = arith.constant 0 : index
      %13 = vector.load %arg6[%c0_11, %c0_12] : memref<8x32xf32, #tpu.memory_space<vmem>>, vector<8x32xf32>
      tpu.vector_store %arg6[%c0_11, %c0_12], %12 {strides = array<i32>} : memref<8x32xf32, #tpu.memory_space<vmem>>, vector<8x32xf32>,
    } else {
    }
    %c0 = arith.constant 0 : index
    %c0_1 = arith.constant 0 : index
    %3 = vector.load %arg6[%c0, %c0_1] : memref<8x32xf32, #tpu.memory_space<vmem>>, vector<8x32xf32>
    %c0_2 = arith.constant 0 : index
    %c0_3 = arith.constant 0 : index
    %4 = vector.load %arg3[%c0_2, %c0_3] : memref<8x16xf32, #tpu.memory_space<vmem>>, vector<8x16xf32>
    %c0_4 = arith.constant 0 : index
    %c0_5 = arith.constant 0 : index
    %5 = vector.load %arg4[%c0_4, %c0_5] : memref<32x16xf32, #tpu.memory_space<vmem>>, vector<32x16xf32>
    %cst = arith.constant dense<0.000000e+00> : vector<8x32xf32>
    %6 = tpu.matmul %4, %5, %cst {dimension_numbers = #tpu.dot_dimension_numbers<[1], [1], [0], [0], [0, 0, 1, 0], [], []>} : vector<8x16xf32>, vector<32x16xf32>, vector<8x32xf32> -> vector<8x32xf32>
    %7 = arith.addf %3, %6 : vector<8x32xf32>
    %c0_6 = arith.constant 0 : index
    %c0_7 = arith.constant 0 : index
    %8 = vector.load %arg6[%c0_6, %c0_7] : memref<8x32xf32, #tpu.memory_space<vmem>>, vector<8x32xf32>
    tpu.vector_store %arg6[%c0_6, %c0_7], %7 {strides = array<i32>} : memref<8x32xf32, #tpu.memory_space<vmem>>, vector<8x32xf32>,
    %c0_i32_8 = arith.constant 0 : i32
    %9 = arith.cmpi eq, %arg2, %c0_i32_8 : i32
    %10 = arith.extui %9 : i1 to i32
    %c0_i32_9 = arith.constant 0 : i32
    %11 = arith.cmpi ne, %10, %c0_i32_9 : i32
    scf.if %11 {
      %c0_10 = arith.constant 0 : index
      %c0_11 = arith.constant 0 : index
      %12 = vector.load %arg6[%c0_10, %c0_11] : memref<8x32xf32, #tpu.memory_space<vmem>>, vector<8x32xf32>
      %c0_12 = arith.constant 0 : index
      %c0_13 = arith.constant 0 : index
      %13 = vector.load %arg5[%c0_12, %c0_13] : memref<8x32xf32, #tpu.memory_space<vmem>>, vector<8x32xf32>
      tpu.vector_store %arg5[%c0_12, %c0_13], %12 {strides = array<i32>} : memref<8x32xf32, #tpu.memory_space<vmem>>, vector<8x32xf32>,
    } else {
    }
    return
  }
  func.func @transform_0(%arg0: i32, %arg1: i32, %arg2: i32) -> (i32, i32) {
    %c0_i32 = arith.constant 0 : i32
    return %arg0, %arg2 : i32, i32
  }
  func.func @transform_1(%arg0: i32, %arg1: i32, %arg2: i32) -> (i32, i32) {
    %c0_i32 = arith.constant 0 : i32
    return %arg1, %arg2 : i32, i32
  }
  func.func @transform_2(%arg0: i32, %arg1: i32, %arg2: i32) -> (i32, i32) {
    %c0_i32 = arith.constant 0 : i32
    return %arg0, %arg1 : i32, i32
  }
}

</mosaic_0001>

<llo_original>
// kernel: tpu_custom_call.1
$region0: #{tpu_custom_call.1}
  #allocation0 [shape = 'u32[]', space=smem, size = 0x4, offset = 0x4, fixed_abs, tag = 'smem constant byte address 0x4 - core index']
  #allocation1 [shape = 'u32[72,128]{1,0:T(1,128)}', space=vmem, size = 0x9000, scoped, tag = 'internal scratch']
  #allocation2 [shape = 'f32[8,32]{1,0:T(8,128)}', space=vmem, size = 0x1000, scoped, tag = 'scratch operand']
  %s0 = inlined_call_operand.vmem [shape: f32[8,16], index: 0, kind: input, shape index: {}]
  %s1 = inlined_call_operand.vmem [shape: f32[32,16], index: 1, kind: input, shape index: {}]
  %s2 = inlined_call_operand.hbm [shape: f32[8,32], index: 2, kind: output, shape index: {}]
  %s3 = sld [smem:[#allocation0]]
  $region26: #{tpu_custom_call.1} parent=0
    _
  %s5 = ssub.s32 1, %s3
  %s6 = scalar_select 0, %s5, %s3
  $region1: #{tpu_custom_call.1} parent=0
    #allocation3 [shape = 'u8[4096]{0}', space=vmem, size = 0x1000, scoped, tag = 'output window, operand 0, single buffered']
    #allocation4 [shape = 's32[1]{0}', space=sflag, size = 0x4, scoped, tag = 'scoped memory for tpu_custom_call.1']
    %7 = vsyncpa [#allocation4], 0
    // Predicated region
    $region2: #{tpu_custom_call.1} parent=1 // pred_check
      _
    $region3: #{tpu_custom_call.1} parent=1 // pred_check_branch
      %9 = sbr.rel (0) target = $region5
    $region4: #{tpu_custom_call.1} parent=1 // pred_region
      _
    $region5: #{tpu_custom_call.1} parent=1 // pred_fallthru
      _
    // Predicated region
    $region6: #{tpu_custom_call.1} parent=1 // pred_check
      _
    $region7: #{tpu_custom_call.1} parent=1 // pred_check_branch
      %11 = sbr.rel (0) target = $region9
    $region8: #{tpu_custom_call.1} parent=1 // pred_region
      _
    $region9: #{tpu_custom_call.1} parent=1 // pred_fallthru
      _
    %p12 = scmp.eq.s32.totalorder 0, 0
    // Predicated region
    $region10: #{tpu_custom_call.1} parent=1 // pred_check
      %p13 = pneg %p12
    $region11: #{tpu_custom_call.1} parent=1 // pred_check_branch
      %15 = sbr.rel (%p13) target = $region13
    $region12: #{tpu_custom_call.1} parent=1 // pred_region
      %vm16 = vcmask 261120
      %17 = vst.msk [vmem:[#allocation2] sm:$0xff] %vm16, 0.0
    $region13: #{tpu_custom_call.1} parent=1 // pred_fallthru
      _
    %v18 = vld [vmem:[#allocation2] sm:$0xff]
    %v19 = vld [vmem:[%s0] sm:$0xff]
    %v20 = vld [vmem:[%s1] sm:$0xff]
    %v21 = vld [vmem:[%s1 + $0x8] sm:$0xff]
    %v22 = vld [vmem:[%s1 + $0x10] sm:$0xff]
    %v23 = vld [vmem:[%s1 + $0x18] sm:$0xff]
    %vm24 = vcmask 130048
    %v26 = vsel %vm24, %v19, 0
    %v29 = vsel %vm24, %v20, 0
    %v32 = vsel %vm24, %v21, 0
    %v35 = vsel %vm24, %v22, 0
    %v38 = vsel %vm24, %v23, 0
    %40 = vmatpush.xpose.msra.mxu0 0.0
    %41 = vmatpush.xpose.msra.mxu0 0.0
    %42 = vmatpush.xpose.msra.mxu0 0.0
    %43 = vmatpush.xpose.msra.mxu0 0.0
    %44 = vmatpush.xpose.msra.mxu0 0.0
    %45 = vmatpush.xpose.msra.mxu0 0.0
    %46 = vmatpush.xpose.msra.mxu0 0.0
    %47 = vmatpush.xpose.msra.mxu0 0.0
    %48 = vmatpush.xpose.msra.mxu0 0.0
    %49 = vmatpush.xpose.msra.mxu0 0.0
    %50 = vmatpush.xpose.msra.mxu0 0.0
    %51 = vmatpush.xpose.msra.mxu0 0.0
    %52 = vmatpush.xpose.msra.mxu0 %v38
    %53 = vmatpush.xpose.msra.mxu0 %v35
    %54 = vmatpush.xpose.msra.mxu0 %v32
    %55 = vmatpush.xpose.msra.mxu0 %v29
    %56 = vmatmul.f32.gmra.mxu0 %v26
    %v57 = vpop.f32.mrf.mxu0
    %v58 = vadd.f32 0.0, %v57
    %59 = vdwg.mxu0
    %v60 = vadd.f32 %v18, %v58
    %vm61 = vcmask 261120
    %62 = vst.msk [vmem:[#allocation2] sm:$0xff] %vm61, %v60
    // Predicated region
    $region14: #{tpu_custom_call.1} parent=1 // pred_check
      %p63 = pneg %p12
    $region15: #{tpu_custom_call.1} parent=1 // pred_check_branch
      %65 = sbr.rel (%p63) target = $region17
    $region16: #{tpu_custom_call.1} parent=1 // pred_region
      %v66 = vld [vmem:[#allocation2] sm:$0xff]
      %67 = vst.msk [vmem:[#allocation3] sm:$0xff] %vm61, %v66
    $region17: #{tpu_custom_call.1} parent=1 // pred_fallthru
      _
    // Predicated region
    $region18: #{tpu_custom_call.1} parent=1 // pred_check
      _
    $region19: #{tpu_custom_call.1} parent=1 // pred_check_branch
      %69 = sbr.rel (0) target = $region21
    $region20: #{tpu_custom_call.1} parent=1 // pred_region
      %71 = vsyncadd [#allocation4], 0
      %s73 = sshll.u32 [#allocation3], 4
      %s74 = int_to_ptr.vmem [resolvable:$true] %s73
      %s75 = sshll.u32 %s2, 4
      %s76 = int_to_ptr.hbm [resolvable:$true] %s75
      %78 = dma.vmem_to_hbm [thread:$0]  %s74, 128, %s76, [#allocation4]
    $region21: #{tpu_custom_call.1} parent=1 // pred_fallthru
      _
    // Predicated region
    $region22: #{tpu_custom_call.1} parent=1 // pred_check
      _
    $region23: #{tpu_custom_call.1} parent=1 // pred_check_branch
      %80 = sbr.rel (0) target = $region25
    $region24: #{tpu_custom_call.1} parent=1 // pred_region
      %82 = dma.done [#allocation4], 128
    $region25: #{tpu_custom_call.1} parent=1 // pred_fallthru
      _
    %83 = vsyncpa [#allocation4], 1

</llo_original>
